<compile_context>
chip_gen: v5e
topology: v5e:2x2
jax: 0.10.0
libtpu: 0.0.40
codegen_flags: <defaults>
</compile_context>

<pallas_src>
import functools
import jax
import jax.numpy as jnp
from jax.experimental import pallas as pl
from jax.experimental.pallas import tpu as pltpu

# ---- configs (the PyTorch module reads these from a global dict) ----
N_EMBD = 32
NUM_HEADS = 4
HEAD_SIZE = N_EMBD // NUM_HEADS
BLOCK_SIZE = 8          # max sequence length (tril buffer size); we use T = BLOCK_SIZE
DROPOUT = 0.0           # eval-mode semantics -> dropout is identity
LN_EPS = 1e-5
MAX_B_BLK = 2048        # hard cap on sequences per grid step (VMEM budget caps further)
MASK_VALUE = -1e30      # large finite negative: NaN-safe even for fully padded rows


def _layernorm(x, g, b):
    mu = jnp.mean(x, axis=-1, keepdims=True)
    var = jnp.mean((x - mu) ** 2, axis=-1, keepdims=True)
    return (x - mu) * jax.lax.rsqrt(var + LN_EPS) * g + b


def block_kernel(x_ref, wqkv_ref, w1_ref, w2_ref, b1_ref, vecs_ref, o_ref,
                 *, b_blk, seq_len):
    x = x_ref[...]                                   # (R, C), R = b_blk * seq_len
    R, C = x.shape
    T = seq_len
    D = HEAD_SIZE

    ln1g = vecs_ref[0]
    ln1b = vecs_ref[1]
    ln2g = vecs_ref[2]
    ln2b = vecs_ref[3]
    b2 = vecs_ref[4]

    # ---- LN1 on the flattened (rows, C) activation ----
    xn1 = _layernorm(x, ln1g, ln1b)

    # ---- fused QKV projection: one (R, C) @ (C, 3C) matmul ----
    # (the C**-0.5 score scale is pre-folded into the q columns of wqkv)
    qkv = jnp.dot(xn1, wqkv_ref[...], preferred_element_type=jnp.float32)  # (R, 3C)
    k = qkv[:, 0:C]
    q = qkv[:, C:2 * C]
    v = qkv[:, 2 * C:3 * C]

    # ---- fold heads into the einsum batch dim: (R, C) -> (H*b_blk, T, D) ----
    # Lane slice per head + leading-axis concat (known-good Mosaic lowerings);
    # avoids a (b, T, H, D) -> (b, H, T, D) jnp.transpose.  Batch is head-major.
    def split_heads(m):
        return jnp.concatenate(
            [m[:, h * D:(h + 1) * D].reshape(b_blk, T, D) for h in range(NUM_HEADS)],
            axis=0)

    qh = split_heads(q)
    kh = split_heads(k)
    vh = split_heads(v)

    row = jax.lax.broadcasted_iota(jnp.int32, (T, T), 0)
    col = jax.lax.broadcasted_iota(jnp.int32, (T, T), 1)
    causal = col <= row                              # (T, T), broadcasts over batch

    # ---- one batched contraction per stage: scores, then P @ V ----
    wei = jnp.einsum('bqd,bkd->bqk', qh, kh,
                     preferred_element_type=jnp.float32)          # (H*b_blk, T, T)
    wei = jnp.where(causal, wei, MASK_VALUE)
    mx = jnp.max(wei, axis=-1, keepdims=True)
    e = jnp.exp(wei - mx)
    p = e * pl.reciprocal(jnp.sum(e, axis=-1, keepdims=True), approx=True)
    oh = jnp.einsum('bqk,bkd->bqd', p, vh,
                    preferred_element_type=jnp.float32)           # (H*b_blk, T, D)

    # back to (R, C): head h of sequence b sits at batch index h*b_blk + b
    attn = jnp.concatenate(
        [oh[h * b_blk:(h + 1) * b_blk].reshape(R, D) for h in range(NUM_HEADS)],
        axis=-1)                                                  # (R, C)
    # NOTE: self.proj and attention/ffn dropout are intentionally NOT applied,
    # matching the PyTorch forward exactly.

    x1 = x + attn

    # ---- LN2 + FeedForward (Linear -> ReLU -> Linear) on flattened rows ----
    xn2 = _layernorm(x1, ln2g, ln2b)
    hdn = jnp.maximum(
        jnp.dot(xn2, w1_ref[...], preferred_element_type=jnp.float32) + b1_ref[0], 0.0)
    ffn = jnp.dot(hdn, w2_ref[...], preferred_element_type=jnp.float32) + b2

    o_ref[...] = x1 + ffn


def _vmem_limit_bytes():
    """Explicit scoped-VMEM limit: ~half of physical VMEM, capped at 64 MiB.
    v5e/v6e (128 MiB physical) -> 64 MiB (well above v5e's 16 MiB scoped default);
    v7x (64 MiB physical)      -> 32 MiB."""
    try:
        cap = int(pltpu.get_tpu_info().vmem_capacity_bytes)
    except Exception:   # conservative fallback if the query is unavailable
        cap = 64 << 20
    return max(32 << 20, min(cap // 2, 64 << 20))


def _pick_b_blk(B, T, C, vmem_limit):
    """Sequences per grid step: the largest block whose estimated f32 working set
    (intermediates + double-buffered in/out blocks, ~22*C bytes/row) fits in ~half
    the scoped VMEM limit, capped at MAX_B_BLK, and forced to give >= 2 grid steps
    when B >= 2 so both v7x TensorCores get work."""
    per_row_bytes = 4 * 22 * C
    budget = vmem_limit // 2
    b_fit = max(1, budget // (per_row_bytes * T))
    b_blk = int(min(B, b_fit, MAX_B_BLK))
    if B >= 2 and b_blk >= B:
        b_blk = (B + 1) // 2            # ceil(B/2) -> a 2-step grid
    return b_blk


def block_forward(x, params):
    wk, wq, wv, ln1g, ln1b, ln2g, ln2b, w1, b1, w2, b2 = params
    B, T, C = x.shape
    H = w1.shape[1]

    # Wrapper-side parameter packing (pure layout plumbing, done once under jit).
    # NOTE: the PyTorch Head scales scores by C**-0.5 with C = n_embd (NOT
    # head_size); that scale is folded into the q columns of the fused weight.
    wqkv = jnp.concatenate([wk, wq * (C ** -0.5), wv], axis=1)             # (C, 3C)
    vecs = jnp.stack([ln1g[0], ln1b[0], ln2g[0], ln2b[0], b2[0]], axis=0)  # (5, C)

    vmem_limit = _vmem_limit_bytes()
    b_blk = _pick_b_blk(B, T, C, vmem_limit)
    r_blk = b_blk * T
    n_steps = pl.cdiv(B, b_blk)
    B_pad = n_steps * b_blk

    x_flat = x.reshape(B * T, C)
    if B_pad != B:  # pad whole sequences; their rows are discarded after the call
        x_flat = jnp.pad(x_flat, ((0, (B_pad - B) * T), (0, 0)))

    kernel = functools.partial(block_kernel, b_blk=b_blk, seq_len=T)

    def full_spec(shape):
        return pl.BlockSpec(shape, lambda i: (0,) * len(shape))

    cost = pl.CostEstimate(
        flops=2 * B_pad * T * (3 * C * C + 2 * T * C + 2 * C * H),
        transcendentals=B_pad * NUM_HEADS * T * (T + 1) + 2 * B_pad * T,
        bytes_accessed=4 * (2 * B_pad * T * C + 3 * C * C + 2 * C * H + H + 5 * C),
    )

    out_flat = pl.pallas_call(
        kernel,
        out_shape=jax.ShapeDtypeStruct((B_pad * T, C), jnp.float32),
        grid=(n_steps,),
        in_specs=[
            pl.BlockSpec((r_blk, C), lambda i: (i, 0)),   # activation row-block
            full_spec((C, 3 * C)),                        # fused [Wk | Wq*scale | Wv]
            full_spec((C, H)),                            # ffn W1
            full_spec((H, C)),                            # ffn W2
            full_spec((1, H)),                            # ffn b1
            full_spec((5, C)),                            # ln1 g/b, ln2 g/b, ffn b2
        ],
        out_specs=pl.BlockSpec((r_blk, C), lambda i: (i, 0)),
        compiler_params=pltpu.CompilerParams(
            dimension_semantics=("parallel",),
            vmem_limit_bytes=vmem_limit),
        cost_estimate=cost,
    )(x_flat, wqkv, w1, w2, b1, vecs)

    return out_flat[:B * T].reshape(B, T, C)


def make_params(key):
    C, H = N_EMBD, 4 * N_EMBD
    ks = jax.random.split(key, 8)
    scale = 0.02
    wk = scale * jax.random.normal(ks[0], (C, C), jnp.float32)
    wq = scale * jax.random.normal(ks[1], (C, C), jnp.float32)
    wv = scale * jax.random.normal(ks[2], (C, C), jnp.float32)
    ln1g = jnp.ones((1, C), jnp.float32)
    ln1b = jnp.zeros((1, C), jnp.float32)
    ln2g = jnp.ones((1, C), jnp.float32)
    ln2b = jnp.zeros((1, C), jnp.float32)
    w1 = scale * jax.random.normal(ks[3], (C, H), jnp.float32)
    b1 = scale * jax.random.normal(ks[4], (1, H), jnp.float32)
    w2 = scale * jax.random.normal(ks[5], (H, C), jnp.float32)
    b2 = scale * jax.random.normal(ks[6], (1, C), jnp.float32)
    return (wk, wq, wv, ln1g, ln1b, ln2g, ln2b, w1, b1, w2, b2)


def block_forward_ref(x, params):
    """Pure-JAX reference replicating the PyTorch forward."""
    wk, wq, wv, ln1g, ln1b, ln2g, ln2b, w1, b1, w2, b2 = params
    B, T, C = x.shape
    xn1 = _layernorm(x, ln1g[0], ln1b[0])
    causal = jnp.tril(jnp.ones((T, T), bool))
    outs = []
    for h in range(NUM_HEADS):
        s = h * HEAD_SIZE
        kh = xn1 @ wk[:, s:s + HEAD_SIZE]
        qh = xn1 @ wq[:, s:s + HEAD_SIZE]
        vh = xn1 @ wv[:, s:s + HEAD_SIZE]
        wei = jnp.einsum('btd,bsd->bts', qh, kh) * C ** (-0.5)
        wei = jnp.where(causal, wei, -jnp.inf)
        wei = jax.nn.softmax(wei, axis=-1)
        outs.append(jnp.einsum('bts,bsd->btd', wei, vh))
    x1 = x + jnp.concatenate(outs, axis=-1)
    xn2 = _layernorm(x1, ln2g[0], ln2b[0])
    ffn = jnp.maximum(xn2 @ w1 + b1[0], 0.0) @ w2 + b2[0]
    return x1 + ffn


if __name__ == "__main__":
    key = jax.random.PRNGKey(0)
    kx, kp = jax.random.split(key)
    params = make_params(kp)

    # Main check (toy config B=2).  Tolerance is DELIBERATELY relaxed from 1e-5 to
    # 1e-3 because softmax normalization now uses the EUP approximate reciprocal.
    B, T, C = 2, BLOCK_SIZE, N_EMBD
    x = jax.random.normal(kx, (B, T, C), jnp.float32)
    out = jax.block_until_ready(block_forward(x, params))
    ref = block_forward_ref(x, params)
    assert out.shape == (B, T, C)
    assert jnp.allclose(out, ref, rtol=1e-3, atol=1e-3), "mismatch vs reference (B=2)"

    # Secondary check: odd B exercises the cdiv grid + sequence-padding path.
    B2 = 3
    x2 = jax.random.normal(jax.random.PRNGKey(1), (B2, T, C), jnp.float32)
    out2 = jax.block_until_ready(block_forward(x2, params))
    ref2 = block_forward_ref(x2, params)
    assert jnp.allclose(out2, ref2, rtol=1e-3, atol=1e-3), "mismatch vs reference (B=3)"

    print("KERNEL_OK")
</pallas_src>

<mosaic_0001>
module attributes {stable_mosaic.version = 11 : i64} {
  func.func @block_kernel(%arg0: i32, %arg1: memref<8x32xf32, #tpu.memory_space<vmem>>, %arg2: memref<32x96xf32, #tpu.memory_space<vmem>>, %arg3: memref<32x128xf32, #tpu.memory_space<vmem>>, %arg4: memref<128x32xf32, #tpu.memory_space<vmem>>, %arg5: memref<1x128xf32, #tpu.memory_space<vmem>>, %arg6: memref<5x32xf32, #tpu.memory_space<vmem>>, %arg7: memref<8x32xf32, #tpu.memory_space<vmem>>) attributes {dimension_semantics = [#tpu.dimension_semantics<parallel>], iteration_bounds = array<i64: 2>, scalar_prefetch = 0 : i64, scratch_operands = 0 : i64, tpu.core_type = #tpu.core_type<tc>, window_params = [{transform_indices = @transform_0, window_bounds = array<i64: 8, 32>}, {pipeline_mode = #tpu.pipeline_mode<synchronous>, transform_indices = @transform_1, window_bounds = array<i64: 32, 96>}, {pipeline_mode = #tpu.pipeline_mode<synchronous>, transform_indices = @transform_2, window_bounds = array<i64: 32, 128>}, {pipeline_mode = #tpu.pipeline_mode<synchronous>, transform_indices = @transform_3, window_bounds = array<i64: 128, 32>}, {pipeline_mode = #tpu.pipeline_mode<synchronous>, transform_indices = @transform_4, window_bounds = array<i64: 1, 128>}, {pipeline_mode = #tpu.pipeline_mode<synchronous>, transform_indices = @transform_5, window_bounds = array<i64: 5, 32>}, {transform_indices = @transform_6, window_bounds = array<i64: 8, 32>}]} {
    %c0 = arith.constant 0 : index
    %c0_0 = arith.constant 0 : index
    %0 = vector.load %arg1[%c0, %c0_0] : memref<8x32xf32, #tpu.memory_space<vmem>>, vector<8x32xf32>
    %c0_1 = arith.constant 0 : index
    %c0_2 = arith.constant 0 : index
    %1 = vector.load %arg6[%c0_1, %c0_2] : memref<5x32xf32, #tpu.memory_space<vmem>>, vector<1x32xf32>
    %2 = vector.shape_cast %1 : vector<1x32xf32> to vector<32xf32>
    %c1 = arith.constant 1 : index
    %c0_3 = arith.constant 0 : index
    %3 = vector.load %arg6[%c1, %c0_3] : memref<5x32xf32, #tpu.memory_space<vmem>>, vector<1x32xf32>
    %4 = vector.shape_cast %3 : vector<1x32xf32> to vector<32xf32>
    %c2 = arith.constant 2 : index
    %c0_4 = arith.constant 0 : index
    %5 = vector.load %arg6[%c2, %c0_4] : memref<5x32xf32, #tpu.memory_space<vmem>>, vector<1x32xf32>
    %6 = vector.shape_cast %5 : vector<1x32xf32> to vector<32xf32>
    %c3 = arith.constant 3 : index
    %c0_5 = arith.constant 0 : index
    %7 = vector.load %arg6[%c3, %c0_5] : memref<5x32xf32, #tpu.memory_space<vmem>>, vector<1x32xf32>
    %8 = vector.shape_cast %7 : vector<1x32xf32> to vector<32xf32>
    %c4 = arith.constant 4 : index
    %c0_6 = arith.constant 0 : index
    %9 = vector.load %arg6[%c4, %c0_6] : memref<5x32xf32, #tpu.memory_space<vmem>>, vector<1x32xf32>
    %10 = vector.shape_cast %9 : vector<1x32xf32> to vector<32xf32>
    %cst = arith.constant dense<0.000000e+00> : vector<8xf32>
    %11 = vector.multi_reduction <add>, %0, %cst [1] : vector<8x32xf32> to vector<8xf32>
    %12 = vector.shape_cast %11 : vector<8xf32> to vector<8x1xf32>
    %cst_7 = arith.constant 3.200000e+01 : f32
    %13 = vector.broadcast %cst_7 : f32 to vector<8x1xf32>
    %14 = arith.divf %12, %13 : vector<8x1xf32>
    %15 = vector.broadcast %14 : vector<8x1xf32> to vector<8x32xf32>
    %16 = arith.subf %0, %15 : vector<8x32xf32>
    %17 = arith.mulf %16, %16 : vector<8x32xf32>
    %cst_8 = arith.constant dense<0.000000e+00> : vector<8xf32>
    %18 = vector.multi_reduction <add>, %17, %cst_8 [1] : vector<8x32xf32> to vector<8xf32>
    %19 = vector.shape_cast %18 : vector<8xf32> to vector<8x1xf32>
    %cst_9 = arith.constant 3.200000e+01 : f32
    %20 = vector.broadcast %cst_9 : f32 to vector<8x1xf32>
    %21 = arith.divf %19, %20 : vector<8x1xf32>
    %22 = vector.broadcast %14 : vector<8x1xf32> to vector<8x32xf32>
    %23 = arith.subf %0, %22 : vector<8x32xf32>
    %cst_10 = arith.constant 9.99999974E-6 : f32
    %24 = vector.broadcast %cst_10 : f32 to vector<8x1xf32>
    %25 = arith.addf %21, %24 : vector<8x1xf32>
    %26 = math.rsqrt %25 : vector<8x1xf32>
    %27 = vector.broadcast %26 : vector<8x1xf32> to vector<8x32xf32>
    %28 = arith.mulf %23, %27 : vector<8x32xf32>
    %29 = vector.shape_cast %2 : vector<32xf32> to vector<1x32xf32>
    %30 = vector.broadcast %29 : vector<1x32xf32> to vector<8x32xf32>
    %31 = arith.mulf %28, %30 : vector<8x32xf32>
    %32 = vector.shape_cast %4 : vector<32xf32> to vector<1x32xf32>
    %33 = vector.broadcast %32 : vector<1x32xf32> to vector<8x32xf32>
    %34 = arith.addf %31, %33 : vector<8x32xf32>
    %c0_11 = arith.constant 0 : index
    %c0_12 = arith.constant 0 : index
    %35 = vector.load %arg2[%c0_11, %c0_12] : memref<32x96xf32, #tpu.memory_space<vmem>>, vector<32x96xf32>
    %cst_13 = arith.constant dense<0.000000e+00> : vector<8x96xf32>
    %36 = tpu.matmul %34, %35, %cst_13 {dimension_numbers = #tpu.dot_dimension_numbers<[1], [0], [0], [1], [0, 0, 1, 1], [], []>} : vector<8x32xf32>, vector<32x96xf32>, vector<8x96xf32> -> vector<8x96xf32>
    %37 = vector.extract_strided_slice %36 {offsets = [0, 0], sizes = [8, 32], strides = [1, 1]} : vector<8x96xf32> to vector<8x32xf32>
    %38 = vector.extract_strided_slice %36 {offsets = [0, 32], sizes = [8, 32], strides = [1, 1]} : vector<8x96xf32> to vector<8x32xf32>
    %39 = vector.extract_strided_slice %36 {offsets = [0, 64], sizes = [8, 32], strides = [1, 1]} : vector<8x96xf32> to vector<8x32xf32>
    %40 = vector.extract_strided_slice %38 {offsets = [0, 0], sizes = [8, 8], strides = [1, 1]} : vector<8x32xf32> to vector<8x8xf32>
    %41 = vector.shape_cast %40 : vector<8x8xf32> to vector<1x8x8xf32>
    %42 = vector.extract_strided_slice %38 {offsets = [0, 8], sizes = [8, 8], strides = [1, 1]} : vector<8x32xf32> to vector<8x8xf32>
    %43 = vector.shape_cast %42 : vector<8x8xf32> to vector<1x8x8xf32>
    %44 = vector.extract_strided_slice %38 {offsets = [0, 16], sizes = [8, 8], strides = [1, 1]} : vector<8x32xf32> to vector<8x8xf32>
    %45 = vector.shape_cast %44 : vector<8x8xf32> to vector<1x8x8xf32>
    %46 = vector.extract_strided_slice %38 {offsets = [0, 24], sizes = [8, 8], strides = [1, 1]} : vector<8x32xf32> to vector<8x8xf32>
    %47 = vector.shape_cast %46 : vector<8x8xf32> to vector<1x8x8xf32>
    %48 = tpu.concatenate %41, %43, %45, %47 in 0 : vector<1x8x8xf32>, vector<1x8x8xf32>, vector<1x8x8xf32>, vector<1x8x8xf32> -> vector<4x8x8xf32>
    %49 = vector.extract_strided_slice %37 {offsets = [0, 0], sizes = [8, 8], strides = [1, 1]} : vector<8x32xf32> to vector<8x8xf32>
    %50 = vector.shape_cast %49 : vector<8x8xf32> to vector<1x8x8xf32>
    %51 = vector.extract_strided_slice %37 {offsets = [0, 8], sizes = [8, 8], strides = [1, 1]} : vector<8x32xf32> to vector<8x8xf32>
    %52 = vector.shape_cast %51 : vector<8x8xf32> to vector<1x8x8xf32>
    %53 = vector.extract_strided_slice %37 {offsets = [0, 16], sizes = [8, 8], strides = [1, 1]} : vector<8x32xf32> to vector<8x8xf32>
    %54 = vector.shape_cast %53 : vector<8x8xf32> to vector<1x8x8xf32>
    %55 = vector.extract_strided_slice %37 {offsets = [0, 24], sizes = [8, 8], strides = [1, 1]} : vector<8x32xf32> to vector<8x8xf32>
    %56 = vector.shape_cast %55 : vector<8x8xf32> to vector<1x8x8xf32>
    %57 = tpu.concatenate %50, %52, %54, %56 in 0 : vector<1x8x8xf32>, vector<1x8x8xf32>, vector<1x8x8xf32>, vector<1x8x8xf32> -> vector<4x8x8xf32>
    %58 = vector.extract_strided_slice %39 {offsets = [0, 0], sizes = [8, 8], strides = [1, 1]} : vector<8x32xf32> to vector<8x8xf32>
    %59 = vector.shape_cast %58 : vector<8x8xf32> to vector<1x8x8xf32>
    %60 = vector.extract_strided_slice %39 {offsets = [0, 8], sizes = [8, 8], strides = [1, 1]} : vector<8x32xf32> to vector<8x8xf32>
    %61 = vector.shape_cast %60 : vector<8x8xf32> to vector<1x8x8xf32>
    %62 = vector.extract_strided_slice %39 {offsets = [0, 16], sizes = [8, 8], strides = [1, 1]} : vector<8x32xf32> to vector<8x8xf32>
    %63 = vector.shape_cast %62 : vector<8x8xf32> to vector<1x8x8xf32>
    %64 = vector.extract_strided_slice %39 {offsets = [0, 24], sizes = [8, 8], strides = [1, 1]} : vector<8x32xf32> to vector<8x8xf32>
    %65 = vector.shape_cast %64 : vector<8x8xf32> to vector<1x8x8xf32>
    %66 = tpu.concatenate %59, %61, %63, %65 in 0 : vector<1x8x8xf32>, vector<1x8x8xf32>, vector<1x8x8xf32>, vector<1x8x8xf32> -> vector<4x8x8xf32>
    %67 = tpu.iota {dimensions = array<i32: 0>} : vector<8x8xi32>
    %68 = tpu.iota {dimensions = array<i32: 1>} : vector<8x8xi32>
    %69 = arith.cmpi sle, %68, %67 : vector<8x8xi32>
    "tpu.trace_start"() <{level = 10 : i32, message = "bqd,bkd->bqk"}> : () -> ()
    %cst_14 = arith.constant dense<0.000000e+00> : vector<4x8x8xf32>
    %70 = tpu.matmul %48, %57, %cst_14 {dimension_numbers = #tpu.dot_dimension_numbers<[2], [2], [1], [1], [0, 0, 0, 1, 1, 1], [0], [0]>} : vector<4x8x8xf32>, vector<4x8x8xf32>, vector<4x8x8xf32> -> vector<4x8x8xf32>
    %cst_15 = arith.constant -1.000000e+30 : f32
    "tpu.trace_stop"() : () -> ()
    %71 = vector.shape_cast %69 : vector<8x8xi1> to vector<1x8x8xi1>
    %72 = vector.broadcast %71 : vector<1x8x8xi1> to vector<4x8x8xi1>
    %73 = vector.broadcast %cst_15 : f32 to vector<4x8x8xf32>
    %74 = arith.select %72, %70, %73 : vector<4x8x8xi1>, vector<4x8x8xf32>
    %cst_16 = arith.constant dense<0xFF800000> : vector<4x8xf32>
    %75 = vector.multi_reduction <maximumf>, %74, %cst_16 [2] : vector<4x8x8xf32> to vector<4x8xf32>
    %76 = vector.shape_cast %75 : vector<4x8xf32> to vector<4x8x1xf32>
    %77 = vector.broadcast %76 : vector<4x8x1xf32> to vector<4x8x8xf32>
    %78 = arith.subf %74, %77 : vector<4x8x8xf32>
    %79 = math.exp %78 : vector<4x8x8xf32>
    %cst_17 = arith.constant dense<0.000000e+00> : vector<4x8xf32>
    %80 = vector.multi_reduction <add>, %79, %cst_17 [2] : vector<4x8x8xf32> to vector<4x8xf32>
    %81 = vector.shape_cast %80 : vector<4x8xf32> to vector<4x8x1xf32>
    %82 = tpu.reciprocal %81 {approx = true} : vector<4x8x1xf32> -> vector<4x8x1xf32>
    %83 = vector.broadcast %82 : vector<4x8x1xf32> to vector<4x8x8xf32>
    %84 = arith.mulf %79, %83 : vector<4x8x8xf32>
    "tpu.trace_start"() <{level = 10 : i32, message = "bqk,bkd->bqd"}> : () -> ()
    %cst_18 = arith.constant dense<0.000000e+00> : vector<4x8x8xf32>
    %85 = tpu.matmul %84, %66, %cst_18 {dimension_numbers = #tpu.dot_dimension_numbers<[2], [1], [1], [2], [0, 0, 0, 1, 1, 2], [0], [0]>} : vector<4x8x8xf32>, vector<4x8x8xf32>, vector<4x8x8xf32> -> vector<4x8x8xf32>
    "tpu.trace_stop"() : () -> ()
    %86 = vector.extract_strided_slice %85 {offsets = [0, 0, 0], sizes = [1, 8, 8], strides = [1, 1, 1]} : vector<4x8x8xf32> to vector<1x8x8xf32>
    %87 = vector.shape_cast %86 : vector<1x8x8xf32> to vector<8x8xf32>
    %88 = vector.extract_strided_slice %85 {offsets = [1, 0, 0], sizes = [1, 8, 8], strides = [1, 1, 1]} : vector<4x8x8xf32> to vector<1x8x8xf32>
    %89 = vector.shape_cast %88 : vector<1x8x8xf32> to vector<8x8xf32>
    %90 = vector.extract_strided_slice %85 {offsets = [2, 0, 0], sizes = [1, 8, 8], strides = [1, 1, 1]} : vector<4x8x8xf32> to vector<1x8x8xf32>
    %91 = vector.shape_cast %90 : vector<1x8x8xf32> to vector<8x8xf32>
    %92 = vector.extract_strided_slice %85 {offsets = [3, 0, 0], sizes = [1, 8, 8], strides = [1, 1, 1]} : vector<4x8x8xf32> to vector<1x8x8xf32>
    %93 = vector.shape_cast %92 : vector<1x8x8xf32> to vector<8x8xf32>
    %94 = tpu.concatenate %87, %89, %91, %93 in 1 : vector<8x8xf32>, vector<8x8xf32>, vector<8x8xf32>, vector<8x8xf32> -> vector<8x32xf32>
    %95 = arith.addf %0, %94 : vector<8x32xf32>
    %cst_19 = arith.constant dense<0.000000e+00> : vector<8xf32>
    %96 = vector.multi_reduction <add>, %95, %cst_19 [1] : vector<8x32xf32> to vector<8xf32>
    %97 = vector.shape_cast %96 : vector<8xf32> to vector<8x1xf32>
    %cst_20 = arith.constant 3.200000e+01 : f32
    %98 = vector.broadcast %cst_20 : f32 to vector<8x1xf32>
    %99 = arith.divf %97, %98 : vector<8x1xf32>
    %100 = vector.broadcast %99 : vector<8x1xf32> to vector<8x32xf32>
    %101 = arith.subf %95, %100 : vector<8x32xf32>
    %102 = arith.mulf %101, %101 : vector<8x32xf32>
    %cst_21 = arith.constant dense<0.000000e+00> : vector<8xf32>
    %103 = vector.multi_reduction <add>, %102, %cst_21 [1] : vector<8x32xf32> to vector<8xf32>
    %104 = vector.shape_cast %103 : vector<8xf32> to vector<8x1xf32>
    %cst_22 = arith.constant 3.200000e+01 : f32
    %105 = vector.broadcast %cst_22 : f32 to vector<8x1xf32>
    %106 = arith.divf %104, %105 : vector<8x1xf32>
    %107 = vector.broadcast %99 : vector<8x1xf32> to vector<8x32xf32>
    %108 = arith.subf %95, %107 : vector<8x32xf32>
    %cst_23 = arith.constant 9.99999974E-6 : f32
    %109 = vector.broadcast %cst_23 : f32 to vector<8x1xf32>
    %110 = arith.addf %106, %109 : vector<8x1xf32>
    %111 = math.rsqrt %110 : vector<8x1xf32>
    %112 = vector.broadcast %111 : vector<8x1xf32> to vector<8x32xf32>
    %113 = arith.mulf %108, %112 : vector<8x32xf32>
    %114 = vector.shape_cast %6 : vector<32xf32> to vector<1x32xf32>
    %115 = vector.broadcast %114 : vector<1x32xf32> to vector<8x32xf32>
    %116 = arith.mulf %113, %115 : vector<8x32xf32>
    %117 = vector.shape_cast %8 : vector<32xf32> to vector<1x32xf32>
    %118 = vector.broadcast %117 : vector<1x32xf32> to vector<8x32xf32>
    %119 = arith.addf %116, %118 : vector<8x32xf32>
    %c0_24 = arith.constant 0 : index
    %c0_25 = arith.constant 0 : index
    %120 = vector.load %arg3[%c0_24, %c0_25] : memref<32x128xf32, #tpu.memory_space<vmem>>, vector<32x128xf32>
    %cst_26 = arith.constant dense<0.000000e+00> : vector<8x128xf32>
    %121 = tpu.matmul %119, %120, %cst_26 {dimension_numbers = #tpu.dot_dimension_numbers<[1], [0], [0], [1], [0, 0, 1, 1], [], []>} : vector<8x32xf32>, vector<32x128xf32>, vector<8x128xf32> -> vector<8x128xf32>
    %c0_27 = arith.constant 0 : index
    %c0_28 = arith.constant 0 : index
    %122 = vector.load %arg5[%c0_27, %c0_28] : memref<1x128xf32, #tpu.memory_space<vmem>>, vector<1x128xf32>
    %123 = vector.shape_cast %122 : vector<1x128xf32> to vector<128xf32>
    %124 = vector.shape_cast %123 : vector<128xf32> to vector<1x128xf32>
    %125 = vector.broadcast %124 : vector<1x128xf32> to vector<8x128xf32>
    %126 = arith.addf %121, %125 : vector<8x128xf32>
    %cst_29 = arith.constant 0.000000e+00 : f32
    %127 = vector.broadcast %cst_29 : f32 to vector<8x128xf32>
    %128 = arith.maximumf %126, %127 : vector<8x128xf32>
    %c0_30 = arith.constant 0 : index
    %c0_31 = arith.constant 0 : index
    %129 = vector.load %arg4[%c0_30, %c0_31] : memref<128x32xf32, #tpu.memory_space<vmem>>, vector<128x32xf32>
    %cst_32 = arith.constant dense<0.000000e+00> : vector<8x32xf32>
    %130 = tpu.matmul %128, %129, %cst_32 {dimension_numbers = #tpu.dot_dimension_numbers<[1], [0], [0], [1], [0, 0, 1, 1], [], []>} : vector<8x128xf32>, vector<128x32xf32>, vector<8x32xf32> -> vector<8x32xf32>
    %131 = vector.shape_cast %10 : vector<32xf32> to vector<1x32xf32>
    %132 = vector.broadcast %131 : vector<1x32xf32> to vector<8x32xf32>
    %133 = arith.addf %130, %132 : vector<8x32xf32>
    %134 = arith.addf %95, %133 : vector<8x32xf32>
    %c0_33 = arith.constant 0 : index
    %c0_34 = arith.constant 0 : index
    %135 = vector.load %arg7[%c0_33, %c0_34] : memref<8x32xf32, #tpu.memory_space<vmem>>, vector<8x32xf32>
    tpu.vector_store %arg7[%c0_33, %c0_34], %134 {strides = array<i32>} : memref<8x32xf32, #tpu.memory_space<vmem>>, vector<8x32xf32>,
    return
  }
  func.func @transform_0(%arg0: i32) -> (i32, i32) {
    %c0_i32 = arith.constant 0 : i32
    %c0_i32_0 = arith.constant 0 : i32
    return %arg0, %c0_i32 : i32, i32
  }
  func.func @transform_1(%arg0: i32) -> (i32, i32) {
    %c0_i32 = arith.constant 0 : i32
    %c0_i32_0 = arith.constant 0 : i32
    %c0_i32_1 = arith.constant 0 : i32
    return %c0_i32, %c0_i32_0 : i32, i32
  }
  func.func @transform_2(%arg0: i32) -> (i32, i32) {
    %c0_i32 = arith.constant 0 : i32
    %c0_i32_0 = arith.constant 0 : i32
    %c0_i32_1 = arith.constant 0 : i32
    return %c0_i32, %c0_i32_0 : i32, i32
  }
  func.func @transform_3(%arg0: i32) -> (i32, i32) {
    %c0_i32 = arith.constant 0 : i32
    %c0_i32_0 = arith.constant 0 : i32
    %c0_i32_1 = arith.constant 0 : i32
    return %c0_i32, %c0_i32_0 : i32, i32
  }
  func.func @transform_4(%arg0: i32) -> (i32, i32) {
    %c0_i32 = arith.constant 0 : i32
    %c0_i32_0 = arith.constant 0 : i32
    %c0_i32_1 = arith.constant 0 : i32
    return %c0_i32, %c0_i32_0 : i32, i32
  }
  func.func @transform_5(%arg0: i32) -> (i32, i32) {
    %c0_i32 = arith.constant 0 : i32
    %c0_i32_0 = arith.constant 0 : i32
    %c0_i32_1 = arith.constant 0 : i32
    return %c0_i32, %c0_i32_0 : i32, i32
  }
  func.func @transform_6(%arg0: i32) -> (i32, i32) {
    %c0_i32 = arith.constant 0 : i32
    %c0_i32_0 = arith.constant 0 : i32
    return %arg0, %c0_i32 : i32, i32
  }
}

</mosaic_0001>

<llo_original>
// kernel: tpu_custom_call.1
$region0: #{tpu_custom_call.1}
  #allocation0 [shape = 'u32[]', space=smem, size = 0x4, offset = 0x4, fixed_abs, tag = 'smem constant byte address 0x4 - core index']
  #allocation1 [shape = 'u32[72,128]{1,0:T(1,128)}', space=vmem, size = 0x9000, scoped, tag = 'internal scratch']
  %s0 = inlined_call_operand.vmem [shape: f32[16,32], index: 0, kind: input, shape index: {}]
  %s1 = inlined_call_operand.vmem [shape: f32[32,96], index: 1, kind: input, shape index: {}]
  %s2 = inlined_call_operand.vmem [shape: f32[32,128], index: 2, kind: input, shape index: {}]
  %s3 = inlined_call_operand.vmem [shape: f32[128,32], index: 3, kind: input, shape index: {}]
  %s4 = inlined_call_operand.vmem [shape: f32[1,128], index: 4, kind: input, shape index: {}]
  %s5 = inlined_call_operand.vmem [shape: f32[5,32], index: 5, kind: input, shape index: {}]
  %s6 = inlined_call_operand.hbm [shape: f32[16,32], index: 6, kind: output, shape index: {}]
  %s7 = sld [smem:[#allocation0]]
  $region57: #{tpu_custom_call.1} parent=0
    _
  %s9 = ssub.s32 1, %s7
  %s10 = scalar_select 0, %s9, %s7
  $region1: #{tpu_custom_call.1} parent=0
    #allocation2 [shape = 'u8[8192]{0}', space=vmem, size = 0x2000, scoped, tag = 'output window, operand 0']
    #allocation3 [shape = 's32[2]{0}', space=sflag, size = 0x8, scoped, tag = 'scoped memory for tpu_custom_call.1']
    %11 = vsyncpa [#allocation3], 0
    %s12 = scalar_lea.sflag [#allocation3], 1
    %13 = vsyncpa %s12, 0
    loop: start=0, step=1, limit=4
    $region2: #{tpu_custom_call.1} parent=1 // loop_pre_header
      _
    $region3: #{tpu_custom_call.1} parent=1 // loop_header
      %s15 = sphi 0, %s19
      %p16 = scmp.ge.s32.totalorder %s15, 4
      %s25 = sphi 0, %s27
      %s28 = sphi 0, %s25
      %s29 = sphi 0, %s28
      %s45 = sphi 0, %s29
      %s49 = sphi 0, %s49
      %s51 = sphi 0, %s49
      %s52 = sphi 0, %s51
      %s66 = sphi 0, %s52
      %s70 = sphi 0, %s70
      %s72 = sphi 0, %s70
      %s73 = sphi 0, %s72
      %s87 = sphi 0, %s73
      %s91 = sphi 0, %s91
      %s93 = sphi 0, %s91
      %s94 = sphi 0, %s93
      %s108 = sphi 0, %s94
      %s112 = sphi 0, %s112
      %s114 = sphi 0, %s112
      %s115 = sphi 0, %s114
      %s129 = sphi 0, %s115
      %s133 = sphi 0, %s133
      %s135 = sphi 0, %s133
      %s136 = sphi 0, %s135
      %s150 = sphi 0, %s136
      %s156 = sphi 0, %s158
      %s159 = sphi 0, %s156
      %s160 = sphi 0, %s159
      %s176 = sphi 0, %s160
    $region4: #{tpu_custom_call.1} parent=1 // loop_header_branch
      %18 = sbr.rel (%p16) target = $region8
    $region5: #{tpu_custom_call.1} parent=1 // loop_body
      %s20 = ssub.s32 %s15, 1
      %s21 = ssub.s32 %s15, 2
      %s22 = sadd.s32 %s15, 1
      %s23 = ssub.s32 %s15, %s22
      %p24 = scmp.eq.s32.totalorder %s23, 0
      %s26 = sadd.s32 %s25, 1
      %s27 = scalar_select %p24, %s25, %s26
      %p30 = pneg %p24
      %p31 = scmp.eq.s32.totalorder %s15, 1
      %p32 = por %p30, %p31
      %p33 = scmp.ne.s32.totalorder %s25, %s28
      %p34 = scmp.eq.s32.totalorder %s15, 0
      %p35 = por %p33, %p34
      %p36 = scmp.ne.s32.totalorder %s25, %s28
      %p37 = scmp.eq.s32.totalorder %s20, 1
      %p38 = por %p36, %p37
      %p39 = scmp.ne.s32.totalorder %s28, %s29
      %p40 = scmp.eq.s32.totalorder %s20, 0
      %p41 = por %p39, %p40
      %p42 = scmp.ne.s32.totalorder %s28, %s29
      %p43 = scmp.eq.s32.totalorder %s21, 1
      %p44 = por %p42, %p43
      %p46 = scmp.ne.s32.totalorder %s29, %s45
      %p47 = scmp.eq.s32.totalorder %s21, 0
      %p48 = por %p46, %p47
      %s50 = sadd.s32 %s49, 1
      %p53 = scmp.eq.s32.totalorder %s15, 1
      %p54 = scmp.ne.s32.totalorder %s49, %s51
      %p55 = scmp.eq.s32.totalorder %s15, 0
      %p56 = por %p54, %p55
      %p57 = scmp.ne.s32.totalorder %s49, %s51
      %p58 = scmp.eq.s32.totalorder %s20, 1
      %p59 = por %p57, %p58
      %p60 = scmp.ne.s32.totalorder %s51, %s52
      %p61 = scmp.eq.s32.totalorder %s20, 0
      %p62 = por %p60, %p61
      %p63 = scmp.ne.s32.totalorder %s51, %s52
      %p64 = scmp.eq.s32.totalorder %s21, 1
      %p65 = por %p63, %p64
      %p67 = scmp.ne.s32.totalorder %s52, %s66
      %p68 = scmp.eq.s32.totalorder %s21, 0
      %p69 = por %p67, %p68
      %s71 = sadd.s32 %s70, 1
      %p74 = scmp.eq.s32.totalorder %s15, 1
      %p75 = scmp.ne.s32.totalorder %s70, %s72
      %p76 = scmp.eq.s32.totalorder %s15, 0
      %p77 = por %p75, %p76
      %p78 = scmp.ne.s32.totalorder %s70, %s72
      %p79 = scmp.eq.s32.totalorder %s20, 1
      %p80 = por %p78, %p79
      %p81 = scmp.ne.s32.totalorder %s72, %s73
      %p82 = scmp.eq.s32.totalorder %s20, 0
      %p83 = por %p81, %p82
      %p84 = scmp.ne.s32.totalorder %s72, %s73
      %p85 = scmp.eq.s32.totalorder %s21, 1
      %p86 = por %p84, %p85
      %p88 = scmp.ne.s32.totalorder %s73, %s87
      %p89 = scmp.eq.s32.totalorder %s21, 0
      %p90 = por %p88, %p89
      %s92 = sadd.s32 %s91, 1
      %p95 = scmp.eq.s32.totalorder %s15, 1
      %p96 = scmp.ne.s32.totalorder %s91, %s93
      %p97 = scmp.eq.s32.totalorder %s15, 0
      %p98 = por %p96, %p97
      %p99 = scmp.ne.s32.totalorder %s91, %s93
      %p100 = scmp.eq.s32.totalorder %s20, 1
      %p101 = por %p99, %p100
      %p102 = scmp.ne.s32.totalorder %s93, %s94
      %p103 = scmp.eq.s32.totalorder %s20, 0
      %p104 = por %p102, %p103
      %p105 = scmp.ne.s32.totalorder %s93, %s94
      %p106 = scmp.eq.s32.totalorder %s21, 1
      %p107 = por %p105, %p106
      %p109 = scmp.ne.s32.totalorder %s94, %s108
      %p110 = scmp.eq.s32.totalorder %s21, 0
      %p111 = por %p109, %p110
      %s113 = sadd.s32 %s112, 1
      %p116 = scmp.eq.s32.totalorder %s15, 1
      %p117 = scmp.ne.s32.totalorder %s112, %s114
      %p118 = scmp.eq.s32.totalorder %s15, 0
      %p119 = por %p117, %p118
      %p120 = scmp.ne.s32.totalorder %s112, %s114
      %p121 = scmp.eq.s32.totalorder %s20, 1
      %p122 = por %p120, %p121
      %p123 = scmp.ne.s32.totalorder %s114, %s115
      %p124 = scmp.eq.s32.totalorder %s20, 0
      %p125 = por %p123, %p124
      %p126 = scmp.ne.s32.totalorder %s114, %s115
      %p127 = scmp.eq.s32.totalorder %s21, 1
      %p128 = por %p126, %p127
      %p130 = scmp.ne.s32.totalorder %s115, %s129
      %p131 = scmp.eq.s32.totalorder %s21, 0
      %p132 = por %p130, %p131
      %s134 = sadd.s32 %s133, 1
      %p137 = scmp.eq.s32.totalorder %s15, 1
      %p138 = scmp.ne.s32.totalorder %s133, %s135
      %p139 = scmp.eq.s32.totalorder %s15, 0
      %p140 = por %p138, %p139
      %p141 = scmp.ne.s32.totalorder %s133, %s135
      %p142 = scmp.eq.s32.totalorder %s20, 1
      %p143 = por %p141, %p142
      %p144 = scmp.ne.s32.totalorder %s135, %s136
      %p145 = scmp.eq.s32.totalorder %s20, 0
      %p146 = por %p144, %p145
      %p147 = scmp.ne.s32.totalorder %s135, %s136
      %p148 = scmp.eq.s32.totalorder %s21, 1
      %p149 = por %p147, %p148
      %p151 = scmp.ne.s32.totalorder %s136, %s150
      %p152 = scmp.eq.s32.totalorder %s21, 0
      %p153 = por %p151, %p152
      %s154 = ssub.s32 %s15, %s22
      %p155 = scmp.eq.s32.totalorder %s154, 0
      %s157 = sadd.s32 %s156, 1
      %s158 = scalar_select %p155, %s156, %s157
      %p161 = pneg %p155
      %p162 = scmp.eq.s32.totalorder %s15, 1
      %p163 = por %p161, %p162
      %p164 = scmp.ne.s32.totalorder %s156, %s159
      %p165 = scmp.eq.s32.totalorder %s15, 0
      %p166 = por %p164, %p165
      %p167 = scmp.ne.s32.totalorder %s156, %s159
      %p168 = scmp.eq.s32.totalorder %s20, 1
      %p169 = por %p167, %p168
      %p170 = scmp.ne.s32.totalorder %s159, %s160
      %p171 = scmp.eq.s32.totalorder %s20, 0
      %p172 = por %p170, %p171
      %p173 = scmp.ne.s32.totalorder %s159, %s160
      %p174 = scmp.eq.s32.totalorder %s21, 1
      %p175 = por %p173, %p174
      %p177 = scmp.ne.s32.totalorder %s160, %s176
      %p178 = scmp.eq.s32.totalorder %s21, 0
      %p179 = por %p177, %p178
      %p180 = scmp.le.s32.totalorder 1, %s15
      %p181 = scmp.lt.s32.totalorder %s15, 3
      %p182 = pnand %p180, %p181
      %p183 = pneg %p182
      // Predicated region
      $region9: #{tpu_custom_call.1} parent=5 // pred_check
        _
      $region10: #{tpu_custom_call.1} parent=5 // pred_check_branch
        %185 = sbr.rel (%p182) target = $region12
      $region11: #{tpu_custom_call.1} parent=5 // pred_region
        %s186 = ssub.s32 %s15, 1
        // Predicated region
        $region13: #{tpu_custom_call.1} parent=11 // pred_check
          %p187 = pneg %p62
        $region14: #{tpu_custom_call.1} parent=11 // pred_check_branch
          %189 = sbr.rel (%p187) target = $region16
        $region15: #{tpu_custom_call.1} parent=11 // pred_region
          _
        $region16: #{tpu_custom_call.1} parent=11 // pred_fallthru
          _
        // Predicated region
        $region17: #{tpu_custom_call.1} parent=11 // pred_check
          %p190 = pneg %p83
        $region18: #{tpu_custom_call.1} parent=11 // pred_check_branch
          %192 = sbr.rel (%p190) target = $region20
        $region19: #{tpu_custom_call.1} parent=11 // pred_region
          _
        $region20: #{tpu_custom_call.1} parent=11 // pred_fallthru
          _
        // Predicated region
        $region21: #{tpu_custom_call.1} parent=11 // pred_check
          %p193 = pneg %p104
        $region22: #{tpu_custom_call.1} parent=11 // pred_check_branch
          %195 = sbr.rel (%p193) target = $region24
        $region23: #{tpu_custom_call.1} parent=11 // pred_region
          _
        $region24: #{tpu_custom_call.1} parent=11 // pred_fallthru
          _
        // Predicated region
        $region25: #{tpu_custom_call.1} parent=11 // pred_check
          %p196 = pneg %p125
        $region26: #{tpu_custom_call.1} parent=11 // pred_check_branch
          %198 = sbr.rel (%p196) target = $region28
        $region27: #{tpu_custom_call.1} parent=11 // pred_region
          _
        $region28: #{tpu_custom_call.1} parent=11 // pred_fallthru
          _
        // Predicated region
        $region29: #{tpu_custom_call.1} parent=11 // pred_check
          %p199 = pneg %p146
        $region30: #{tpu_custom_call.1} parent=11 // pred_check_branch
          %201 = sbr.rel (%p199) target = $region32
        $region31: #{tpu_custom_call.1} parent=11 // pred_region
          _
        $region32: #{tpu_custom_call.1} parent=11 // pred_fallthru
          _
      $region12: #{tpu_custom_call.1} parent=5 // pred_fallthru
        _
      %p202 = scmp.lt.s32.totalorder %s15, 2
      // Predicated region
      $region33: #{tpu_custom_call.1} parent=5 // pred_check
        %p203 = pneg %p202
      $region34: #{tpu_custom_call.1} parent=5 // pred_check_branch
        %205 = sbr.rel (%p203) target = $region36
      $region35: #{tpu_custom_call.1} parent=5 // pred_region
        // Predicated region
        $region37: #{tpu_custom_call.1} parent=35 // pred_check
          %p206 = pneg %p35
        $region38: #{tpu_custom_call.1} parent=35 // pred_check_branch
          %208 = sbr.rel (%p206) target = $region40
        $region39: #{tpu_custom_call.1} parent=35 // pred_region
          %p209 = scmp.lt.s32.totalorder %s15, 1
          %s210 = scalar_select %p209, %s15, 1
          %s211 = smul.addr %s210, 8
          %s212 = scalar_lea.vmem %s0, %s211
        $region40: #{tpu_custom_call.1} parent=35 // pred_fallthru
          _
      $region36: #{tpu_custom_call.1} parent=5 // pred_fallthru
        _
      %p213 = scmp.le.s32.totalorder 1, %s15
      %p214 = scmp.lt.s32.totalorder %s15, 3
      %p215 = pnand %p213, %p214
      %p216 = pneg %p215
      // Predicated region
      $region41: #{tpu_custom_call.1} parent=5 // pred_check
        _
      $region42: #{tpu_custom_call.1} parent=5 // pred_check_branch
        %218 = sbr.rel (%p215) target = $region44
      $region43: #{tpu_custom_call.1} parent=5 // pred_region
        %s219 = ssub.s32 %s15, 1
        %p220 = scmp.lt.s32.totalorder %s20, 1
        %s221 = scalar_select %p220, %s20, 1
        %s222 = smul.addr %s221, 8
        %s223 = scalar_lea.vmem %s0, %s222
        %p224 = pneg %p41
        %p225 = pneg %p38
        %p226 = pneg %p62
        %p227 = pneg %p59
        %p228 = pneg %p83
        %p229 = pneg %p80
        %p230 = pneg %p104
        %p231 = pneg %p101
        %p232 = pneg %p125
        %p233 = pneg %p122
        %p234 = pneg %p146
        %p235 = pneg %p143
        %p236 = pneg %p172
        %p237 = pneg %p169
        %s238 = sand.u32 %s159, 1
        %s239 = scalar_lea.sflag [#allocation3], %s238
        %s240 = sand.u32 %s159, 1
        %s241 = smul.addr %s240, 8
        %s242 = scalar_lea.vmem [#allocation2], %s241
        %p243 = scmp.lt.s32.totalorder %s20, 1
        %s244 = scalar_select %p243, %s20, 1
        %s245 = smul.addr %s244, 8
        %s246 = scalar_lea.vmem %s0, %s245
        %v247 = vld [vmem:[%s246] sm:$0xff]
        %v248 = vld [vmem:[%s5] sm:$0x1]
        %v249 = vld [vmem:[%s5 + $0x1] sm:$0x1]
        %v250 = vld [vmem:[%s5 + $0x2] sm:$0x1]
        %v251 = vld [vmem:[%s5 + $0x3] sm:$0x1]
        %v252 = vld [vmem:[%s5 + $0x4] sm:$0x1]
        %vm253 = vcmask 261120
        %v254 = vsel %vm253, %v247, 0.0
        %255 = vadd.xlane.f32.xlu0 %v254
        %v256 = vpop.xlane.xlu0 %255
        %v257 = vrcp.pop 32.0
        %v258 = vmul.f32 32.0, %v257
        %v259 = vsub.f32 1.0, %v258
        %v260 = vmul.f32 %v257, %v259
        %v261 = vadd.f32 %v257, %v260
        %vm262 = vweird.f32 %v257
        %v263 = vsel %vm262, %v257, %v261
        %v264 = vmul.f32 %v256, %v263
        %v265 = vsub.f32 %v247, %v264
        %v266 = vmul.f32 %v265, %v265
        %v267 = vsel %vm253, %v266, 0.0
        %268 = vadd.xlane.f32.xlu0 %v267
        %v269 = vpop.xlane.xlu0 %268
        %v270 = vmul.f32 %v269, %v263
        %v271 = vadd.f32 %v270, 1e-05
        %v272 = vrsqrt.pop %v271
        %v273 = vmul.f32 %v272, %v271
        %v274 = vmul.f32 %v273, %v272
        %v275 = vmul.f32 0.5, %v274
        %v276 = vsub.f32 1.5, %v275
        %v277 = vmul.f32 %v272, %v276
        %vm278 = vweird.f32 %v271
        %vm279 = vweird.f32 %v272
        %vm280 = vmor %vm278, %vm279
        %v281 = vsel %vm280, %v272, %v277
        %v282 = vmul.f32 %v265, %v281
        %v283 = vperm.slane %v248, 0
        %v284 = vmul.f32 %v282, %v283
        %v285 = vperm.slane %v249, 0
        %v286 = vadd.f32 %v284, %v285
        %v287 = vld [vmem:[%s1] sm:$0xff]
        %v288 = vld [vmem:[%s1 + $0x8] sm:$0xff]
        %v289 = vld [vmem:[%s1 + $0x10] sm:$0xff]
        %v290 = vld [vmem:[%s1 + $0x18] sm:$0xff]
        %v292 = vsel %vm253, %v286, 0
        %294 = vmatpush.msra.mxu0 0.0
        %295 = vmatpush.msra.mxu0 0.0
        %296 = vmatpush.msra.mxu0 0.0
        %297 = vmatpush.msra.mxu0 0.0
        %298 = vmatpush.msra.mxu0 0.0
        %299 = vmatpush.msra.mxu0 0.0
        %300 = vmatpush.msra.mxu0 0.0
        %301 = vmatpush.msra.mxu0 0.0
        %302 = vmatpush.msra.mxu0 0.0
        %303 = vmatpush.msra.mxu0 0.0
        %304 = vmatpush.msra.mxu0 0.0
        %305 = vmatpush.msra.mxu0 0.0
        %306 = vmatpush.msra.mxu0 %v290
        %307 = vmatpush.msra.mxu0 %v289
        %308 = vmatpush.msra.mxu0 %v288
        %309 = vmatpush.msra.mxu0 %v287
        %310 = vmatmul.f32.gmra.mxu0 %v292
        %v311 = vpop.f32.mrf.mxu0
        %v312 = vadd.f32 0.0, %v311
        %313 = vdwg.mxu0
        %315 = vrot.lane.b32.xlu0 %v312, 120
        %v316 = vpop.permute.xlu0 %315
        %317 = vrot.lane.b32.xlu0 %v312, 112
        %v318 = vpop.permute.xlu0 %317
        %319 = vrot.lane.b32.xlu0 %v312, 104
        %v320 = vpop.permute.xlu0 %319
        %v321 = vlaneseq
        %v322 = vshrl.u32 %v321, 7
        %v323 = vlaneseq
        %v324 = vand.u32 %v323, 127
        %vm325 = vcmp.le.s32.totalorder %v324, %v322
        %326 = vrot.lane.b32.xlu0 %v312, 96
        %v327 = vpop.permute.xlu0 %326
        %vm328 = vcmask 64512
        %v329 = vsel %vm328, %v327, 0
        %v331 = vsel %vm328, %v312, 0
        %333 = vmatpush.xpose.msra.mxu0 0.0
        %334 = vmatpush.xpose.msra.mxu0 0.0
        %335 = vmatpush.xpose.msra.mxu0 0.0
        %336 = vmatpush.xpose.msra.mxu0 0.0
        %337 = vmatpush.xpose.msra.mxu0 0.0
        %338 = vmatpush.xpose.msra.mxu0 0.0
        %339 = vmatpush.xpose.msra.mxu0 0.0
        %340 = vmatpush.xpose.msra.mxu0 0.0
        %341 = vmatpush.xpose.msra.mxu0 0.0
        %342 = vmatpush.xpose.msra.mxu0 0.0
        %343 = vmatpush.xpose.msra.mxu0 0.0
        %344 = vmatpush.xpose.msra.mxu0 0.0
        %345 = vmatpush.xpose.msra.mxu0 0.0
        %346 = vmatpush.xpose.msra.mxu0 0.0
        %347 = vmatpush.xpose.msra.mxu0 0.0
        %348 = vmatpush.xpose.msra.mxu0 %v331
        %349 = vmatmul.f32.gmra.mxu0 %v329
        %v350 = vpop.f32.mrf.mxu0
        %v351 = vadd.f32 0.0, %v350
        %352 = vdwg.mxu0
        %353 = vrot.lane.b32.xlu0 %v316, 96
        %v354 = vpop.permute.xlu0 %353
        %v355 = vsel %vm328, %v354, 0
        %v357 = vsel %vm328, %v316, 0
        %359 = vmatpush.xpose.msra.mxu0 0.0
        %360 = vmatpush.xpose.msra.mxu0 0.0
        %361 = vmatpush.xpose.msra.mxu0 0.0
        %362 = vmatpush.xpose.msra.mxu0 0.0
        %363 = vmatpush.xpose.msra.mxu0 0.0
        %364 = vmatpush.xpose.msra.mxu0 0.0
        %365 = vmatpush.xpose.msra.mxu0 0.0
        %366 = vmatpush.xpose.msra.mxu0 0.0
        %367 = vmatpush.xpose.msra.mxu0 0.0
        %368 = vmatpush.xpose.msra.mxu0 0.0
        %369 = vmatpush.xpose.msra.mxu0 0.0
        %370 = vmatpush.xpose.msra.mxu0 0.0
        %371 = vmatpush.xpose.msra.mxu0 0.0
        %372 = vmatpush.xpose.msra.mxu0 0.0
        %373 = vmatpush.xpose.msra.mxu0 0.0
        %374 = vmatpush.xpose.msra.mxu0 %v357
        %375 = vmatmul.f32.gmra.mxu0 %v355
        %v376 = vpop.f32.mrf.mxu0
        %v377 = vadd.f32 0.0, %v376
        %378 = vdwg.mxu0
        %379 = vrot.lane.b32.xlu0 %v318, 96
        %v380 = vpop.permute.xlu0 %379
        %v381 = vsel %vm328, %v380, 0
        %v383 = vsel %vm328, %v318, 0
        %385 = vmatpush.xpose.msra.mxu0 0.0
        %386 = vmatpush.xpose.msra.mxu0 0.0
        %387 = vmatpush.xpose.msra.mxu0 0.0
        %388 = vmatpush.xpose.msra.mxu0 0.0
        %389 = vmatpush.xpose.msra.mxu0 0.0
        %390 = vmatpush.xpose.msra.mxu0 0.0
        %391 = vmatpush.xpose.msra.mxu0 0.0
        %392 = vmatpush.xpose.msra.mxu0 0.0
        %393 = vmatpush.xpose.msra.mxu0 0.0
        %394 = vmatpush.xpose.msra.mxu0 0.0
        %395 = vmatpush.xpose.msra.mxu0 0.0
        %396 = vmatpush.xpose.msra.mxu0 0.0
        %397 = vmatpush.xpose.msra.mxu0 0.0
        %398 = vmatpush.xpose.msra.mxu0 0.0
        %399 = vmatpush.xpose.msra.mxu0 0.0
        %400 = vmatpush.xpose.msra.mxu0 %v383
        %401 = vmatmul.f32.gmra.mxu0 %v381
        %v402 = vpop.f32.mrf.mxu0
        %v403 = vadd.f32 0.0, %v402
        %404 = vdwg.mxu0
        %405 = vrot.lane.b32.xlu0 %v320, 96
        %v406 = vpop.permute.xlu0 %405
        %v407 = vsel %vm328, %v406, 0
        %v409 = vsel %vm328, %v320, 0
        %411 = vmatpush.xpose.msra.mxu0 0.0
        %412 = vmatpush.xpose.msra.mxu0 0.0
        %413 = vmatpush.xpose.msra.mxu0 0.0
        %414 = vmatpush.xpose.msra.mxu0 0.0
        %415 = vmatpush.xpose.msra.mxu0 0.0
        %416 = vmatpush.xpose.msra.mxu0 0.0
        %417 = vmatpush.xpose.msra.mxu0 0.0
        %418 = vmatpush.xpose.msra.mxu0 0.0
        %419 = vmatpush.xpose.msra.mxu0 0.0
        %420 = vmatpush.xpose.msra.mxu0 0.0
        %421 = vmatpush.xpose.msra.mxu0 0.0
        %422 = vmatpush.xpose.msra.mxu0 0.0
        %423 = vmatpush.xpose.msra.mxu0 0.0
        %424 = vmatpush.xpose.msra.mxu0 0.0
        %425 = vmatpush.xpose.msra.mxu0 0.0
        %426 = vmatpush.xpose.msra.mxu0 %v409
        %427 = vmatmul.f32.gmra.mxu0 %v407
        %v428 = vpop.f32.mrf.mxu0
        %v429 = vadd.f32 0.0, %v428
        %430 = vdwg.mxu0
        %v431 = vsel %vm325, 1, 0
        %vm432 = vcmp.eq.s32.totalorder %v431, 1
        %v433 = vsel %vm432, %v351, -1e+30
        %v434 = vsel %vm432, %v377, -1e+30
        %v435 = vsel %vm432, %v403, -1e+30
        %v436 = vsel %vm432, %v429, -1e+30
        %v437 = vsel %vm328, %v433, -inf
        %438 = vmax.xlane.f32.xlu0 %v437
        %v439 = vpop.xlane.xlu0 %438
        %v440 = vsel %vm328, %v434, -inf
        %441 = vmax.xlane.f32.xlu0 %v440
        %v442 = vpop.xlane.xlu0 %441
        %v443 = vsel %vm328, %v435, -inf
        %444 = vmax.xlane.f32.xlu0 %v443
        %v445 = vpop.xlane.xlu0 %444
        %v446 = vsel %vm328, %v436, -inf
        %447 = vmax.xlane.f32.xlu0 %v446
        %v448 = vpop.xlane.xlu0 %447
        %v449 = vsub.f32 %v433, %v439
        %v450 = vsub.f32 %v434, %v442
        %v451 = vsub.f32 %v435, %v445
        %v452 = vsub.f32 %v436, %v448
        %v453 = vmul.f32 %v449, 1.442695
        %v454 = vpow.pop %v453
        %v455 = vmul.f32 %v450, 1.442695
        %v456 = vpow.pop %v455
        %v457 = vmul.f32 %v451, 1.442695
        %v458 = vpow.pop %v457
        %v459 = vmul.f32 %v452, 1.442695
        %v460 = vpow.pop %v459
        %v461 = vsel %vm328, %v454, 0.0
        %462 = vadd.xlane.f32.xlu0 %v461
        %v463 = vpop.xlane.xlu0 %462
        %v464 = vsel %vm328, %v456, 0.0
        %465 = vadd.xlane.f32.xlu0 %v464
        %v466 = vpop.xlane.xlu0 %465
        %v467 = vsel %vm328, %v458, 0.0
        %468 = vadd.xlane.f32.xlu0 %v467
        %v469 = vpop.xlane.xlu0 %468
        %v470 = vsel %vm328, %v460, 0.0
        %471 = vadd.xlane.f32.xlu0 %v470
        %v472 = vpop.xlane.xlu0 %471
        %v473 = vrcp.pop %v463
        %v474 = vrcp.pop %v466
        %v475 = vrcp.pop %v469
        %v476 = vrcp.pop %v472
        %v477 = vmul.f32 %v454, %v473
        %v478 = vmul.f32 %v456, %v474
        %v479 = vmul.f32 %v458, %v475
        %v480 = vmul.f32 %v460, %v476
        %481 = vrot.lane.b32.xlu0 %v312, 64
        %v482 = vpop.permute.xlu0 %481
        %v485 = vsel %vm328, %v477, 0
        %487 = vmatpush.msra.mxu0 0.0
        %488 = vmatpush.msra.mxu0 0.0
        %489 = vmatpush.msra.mxu0 0.0
        %490 = vmatpush.msra.mxu0 0.0
        %491 = vmatpush.msra.mxu0 0.0
        %492 = vmatpush.msra.mxu0 0.0
        %493 = vmatpush.msra.mxu0 0.0
        %494 = vmatpush.msra.mxu0 0.0
        %495 = vmatpush.msra.mxu0 0.0
        %496 = vmatpush.msra.mxu0 0.0
        %497 = vmatpush.msra.mxu0 0.0
        %498 = vmatpush.msra.mxu0 0.0
        %499 = vmatpush.msra.mxu0 0.0
        %500 = vmatpush.msra.mxu0 0.0
        %501 = vmatpush.msra.mxu0 0.0
        %502 = vmatpush.msra.mxu0 %v482
        %503 = vmatmul.f32.gmra.mxu0 %v485
        %v504 = vpop.f32.mrf.mxu0
        %v505 = vadd.f32 0.0, %v504
        %506 = vdwg.mxu0
        %507 = vrot.lane.b32.xlu0 %v316, 64
        %v508 = vpop.permute.xlu0 %507
        %v511 = vsel %vm328, %v478, 0
        %513 = vmatpush.msra.mxu0 0.0
        %514 = vmatpush.msra.mxu0 0.0
        %515 = vmatpush.msra.mxu0 0.0
        %516 = vmatpush.msra.mxu0 0.0
        %517 = vmatpush.msra.mxu0 0.0
        %518 = vmatpush.msra.mxu0 0.0
        %519 = vmatpush.msra.mxu0 0.0
        %520 = vmatpush.msra.mxu0 0.0
        %521 = vmatpush.msra.mxu0 0.0
        %522 = vmatpush.msra.mxu0 0.0
        %523 = vmatpush.msra.mxu0 0.0
        %524 = vmatpush.msra.mxu0 0.0
        %525 = vmatpush.msra.mxu0 0.0
        %526 = vmatpush.msra.mxu0 0.0
        %527 = vmatpush.msra.mxu0 0.0
        %528 = vmatpush.msra.mxu0 %v508
        %529 = vmatmul.f32.gmra.mxu0 %v511
        %v530 = vpop.f32.mrf.mxu0
        %v531 = vadd.f32 0.0, %v530
        %532 = vdwg.mxu0
        %533 = vrot.lane.b32.xlu0 %v318, 64
        %v534 = vpop.permute.xlu0 %533
        %v537 = vsel %vm328, %v479, 0
        %539 = vmatpush.msra.mxu0 0.0
        %540 = vmatpush.msra.mxu0 0.0
        %541 = vmatpush.msra.mxu0 0.0
        %542 = vmatpush.msra.mxu0 0.0
        %543 = vmatpush.msra.mxu0 0.0
        %544 = vmatpush.msra.mxu0 0.0
        %545 = vmatpush.msra.mxu0 0.0
        %546 = vmatpush.msra.mxu0 0.0
        %547 = vmatpush.msra.mxu0 0.0
        %548 = vmatpush.msra.mxu0 0.0
        %549 = vmatpush.msra.mxu0 0.0
        %550 = vmatpush.msra.mxu0 0.0
        %551 = vmatpush.msra.mxu0 0.0
        %552 = vmatpush.msra.mxu0 0.0
        %553 = vmatpush.msra.mxu0 0.0
        %554 = vmatpush.msra.mxu0 %v534
        %555 = vmatmul.f32.gmra.mxu0 %v537
        %v556 = vpop.f32.mrf.mxu0
        %v557 = vadd.f32 0.0, %v556
        %558 = vdwg.mxu0
        %559 = vrot.lane.b32.xlu0 %v320, 64
        %v560 = vpop.permute.xlu0 %559
        %v563 = vsel %vm328, %v480, 0
        %565 = vmatpush.msra.mxu0 0.0
        %566 = vmatpush.msra.mxu0 0.0
        %567 = vmatpush.msra.mxu0 0.0
        %568 = vmatpush.msra.mxu0 0.0
        %569 = vmatpush.msra.mxu0 0.0
        %570 = vmatpush.msra.mxu0 0.0
        %571 = vmatpush.msra.mxu0 0.0
        %572 = vmatpush.msra.mxu0 0.0
        %573 = vmatpush.msra.mxu0 0.0
        %574 = vmatpush.msra.mxu0 0.0
        %575 = vmatpush.msra.mxu0 0.0
        %576 = vmatpush.msra.mxu0 0.0
        %577 = vmatpush.msra.mxu0 0.0
        %578 = vmatpush.msra.mxu0 0.0
        %579 = vmatpush.msra.mxu0 0.0
        %580 = vmatpush.msra.mxu0 %v560
        %581 = vmatmul.f32.gmra.mxu0 %v563
        %v582 = vpop.f32.mrf.mxu0
        %v583 = vadd.f32 0.0, %v582
        %584 = vdwg.mxu0
        %586 = vrot.lane.b32.xlu0 %v531, 8
        %v587 = vpop.permute.xlu0 %586
        %590 = vrot.lane.b32.xlu0 %v557, 16
        %v591 = vpop.permute.xlu0 %590
        %594 = vrot.lane.b32.xlu0 %v583, 24
        %v595 = vpop.permute.xlu0 %594
        %v597 = vsel %vm328, %v505, %v587
        %vm598 = vcmask 130048
        %v599 = vsel %vm598, %v597, %v591
        %vm600 = vcmask 195584
        %v601 = vsel %vm600, %v599, %v595
        %v602 = vadd.f32 %v247, %v601
        %v603 = vsel %vm253, %v602, 0.0
        %604 = vadd.xlane.f32.xlu0 %v603
        %v605 = vpop.xlane.xlu0 %604
        %v606 = vmul.f32 %v605, %v263
        %v607 = vsub.f32 %v602, %v606
        %v608 = vmul.f32 %v607, %v607
        %v609 = vsel %vm253, %v608, 0.0
        %610 = vadd.xlane.f32.xlu0 %v609
        %v611 = vpop.xlane.xlu0 %610
        %v612 = vmul.f32 %v611, %v263
        %v613 = vadd.f32 %v612, 1e-05
        %v614 = vrsqrt.pop %v613
        %v615 = vmul.f32 %v614, %v613
        %v616 = vmul.f32 %v615, %v614
        %v617 = vmul.f32 0.5, %v616
        %v618 = vsub.f32 1.5, %v617
        %v619 = vmul.f32 %v614, %v618
        %vm620 = vweird.f32 %v613
        %vm621 = vweird.f32 %v614
        %vm622 = vmor %vm620, %vm621
        %v623 = vsel %vm622, %v614, %v619
        %v624 = vmul.f32 %v607, %v623
        %v625 = vperm.slane %v250, 0
        %v626 = vmul.f32 %v624, %v625
        %v627 = vperm.slane %v251, 0
        %v628 = vadd.f32 %v626, %v627
        %v629 = vld [vmem:[%s2] sm:$0xff]
        %v630 = vld [vmem:[%s2 + $0x8] sm:$0xff]
        %v631 = vld [vmem:[%s2 + $0x10] sm:$0xff]
        %v632 = vld [vmem:[%s2 + $0x18] sm:$0xff]
        %v633 = vld [vmem:[%s4] sm:$0x1]
        %v635 = vperm.slane %v633, 0
        %v638 = vsel %vm253, %v628, 0
        %640 = vmatpush.msra.mxu0 0.0
        %641 = vmatpush.msra.mxu0 0.0
        %642 = vmatpush.msra.mxu0 0.0
        %643 = vmatpush.msra.mxu0 0.0
        %644 = vmatpush.msra.mxu0 0.0
        %645 = vmatpush.msra.mxu0 0.0
        %646 = vmatpush.msra.mxu0 0.0
        %647 = vmatpush.msra.mxu0 0.0
        %648 = vmatpush.msra.mxu0 0.0
        %649 = vmatpush.msra.mxu0 0.0
        %650 = vmatpush.msra.mxu0 0.0
        %651 = vmatpush.msra.mxu0 0.0
        %652 = vmatpush.msra.mxu0 %v632
        %653 = vmatpush.msra.mxu0 %v631
        %654 = vmatpush.msra.mxu0 %v630
        %655 = vmatpush.msra.mxu0 %v629
        %656 = vmatmul.f32.gmra.mxu0 %v638
        %v657 = vpop.f32.mrf.mxu0
        %v658 = vadd.f32 %v635, %v657
        %659 = vdwg.mxu0
        %v660 = vmax.f32 %v658, 0.0
        %v661 = vld [vmem:[%s3] sm:$0xff]
        %v662 = vld [vmem:[%s3 + $0x8] sm:$0xff]
        %v663 = vld [vmem:[%s3 + $0x10] sm:$0xff]
        %v664 = vld [vmem:[%s3 + $0x18] sm:$0xff]
        %v665 = vld [vmem:[%s3 + $0x20] sm:$0xff]
        %v666 = vld [vmem:[%s3 + $0x28] sm:$0xff]
        %v667 = vld [vmem:[%s3 + $0x30] sm:$0xff]
        %v668 = vld [vmem:[%s3 + $0x38] sm:$0xff]
        %v669 = vld [vmem:[%s3 + $0x40] sm:$0xff]
        %v670 = vld [vmem:[%s3 + $0x48] sm:$0xff]
        %v671 = vld [vmem:[%s3 + $0x50] sm:$0xff]
        %v672 = vld [vmem:[%s3 + $0x58] sm:$0xff]
        %v673 = vld [vmem:[%s3 + $0x60] sm:$0xff]
        %v674 = vld [vmem:[%s3 + $0x68] sm:$0xff]
        %v675 = vld [vmem:[%s3 + $0x70] sm:$0xff]
        %v676 = vld [vmem:[%s3 + $0x78] sm:$0xff]
        %v677 = vperm.slane %v252, 0
        %678 = vmatpush.msra.mxu0 %v676
        %679 = vmatpush.msra.mxu0 %v675
        %680 = vmatpush.msra.mxu0 %v674
        %681 = vmatpush.msra.mxu0 %v673
        %682 = vmatpush.msra.mxu0 %v672
        %683 = vmatpush.msra.mxu0 %v671
        %684 = vmatpush.msra.mxu0 %v670
        %685 = vmatpush.msra.mxu0 %v669
        %686 = vmatpush.msra.mxu0 %v668
        %687 = vmatpush.msra.mxu0 %v667
        %688 = vmatpush.msra.mxu0 %v666
        %689 = vmatpush.msra.mxu0 %v665
        %690 = vmatpush.msra.mxu0 %v664
        %691 = vmatpush.msra.mxu0 %v663
        %692 = vmatpush.msra.mxu0 %v662
        %693 = vmatpush.msra.mxu0 %v661
        %694 = vmatmul.f32.gmra.mxu0 %v660
        %v695 = vpop.f32.mrf.mxu0
        %v696 = vadd.f32 %v677, %v695
        %697 = vdwg.mxu0
        %v698 = vadd.f32 %v602, %v696
        %699 = vst.msk [vmem:[%s242] sm:$0xff] %vm253, %v698
        %s700 = sand.u32 %s159, 1
        %s701 = scalar_lea.sflag [#allocation3], %s700
        %s702 = sand.u32 %s159, 1
        %s703 = smul.addr %s702, 8
        %s704 = scalar_lea.vmem [#allocation2], %s703
        // Predicated region
        $region45: #{tpu_custom_call.1} parent=43 // pred_check
          %p705 = pneg %p169
        $region46: #{tpu_custom_call.1} parent=43 // pred_check_branch
          %707 = sbr.rel (%p705) target = $region48
        $region47: #{tpu_custom_call.1} parent=43 // pred_region
          %709 = vsyncadd %s701, 0
          %s710 = smul.addr %s20, 8
          %s711 = scalar_lea.hbm %s6, %s710
          %s713 = sshll.u32 %s704, 4
          %s714 = int_to_ptr.vmem [resolvable:$true] %s713
          %s715 = sshll.u32 %s711, 4
          %s716 = int_to_ptr.hbm [resolvable:$true] %s715
          %718 = dma.vmem_to_hbm [thread:$0]  %s714, 128, %s716, %s701
        $region48: #{tpu_custom_call.1} parent=43 // pred_fallthru
          _
      $region44: #{tpu_custom_call.1} parent=5 // pred_fallthru
        _
      %p719 = scmp.le.s32.totalorder 2, %s15
      // Predicated region
      $region49: #{tpu_custom_call.1} parent=5 // pred_check
        %p720 = pneg %p719
      $region50: #{tpu_custom_call.1} parent=5 // pred_check_branch
        %722 = sbr.rel (%p720) target = $region52
      $region51: #{tpu_custom_call.1} parent=5 // pred_region
        %s723 = ssub.s32 %s15, 2
        // Predicated region
        $region53: #{tpu_custom_call.1} parent=51 // pred_check
          %p724 = pneg %p175
        $region54: #{tpu_custom_call.1} parent=51 // pred_check_branch
          %726 = sbr.rel (%p724) target = $region56
        $region55: #{tpu_custom_call.1} parent=51 // pred_region
          %s727 = sand.u32 %s160, 1
          %s728 = scalar_lea.sflag [#allocation3], %s727
          %s729 = sand.u32 %s160, 1
          %s730 = smul.addr %s729, 8
          %s731 = scalar_lea.vmem [#allocation2], %s730
          %733 = dma.done %s728, 128
        $region56: #{tpu_custom_call.1} parent=51 // pred_fallthru
          _
      $region52: #{tpu_custom_call.1} parent=5 // pred_fallthru
        _
    $region6: #{tpu_custom_call.1} parent=1 // loop_footer
      %s19 = sadd.s32 1, %s15
    $region7: #{tpu_custom_call.1} parent=1 // loop_footer_branch
      %14 = sbr.rel target = $region3
    $region8: #{tpu_custom_call.1} parent=1 // loop_exit
      _
    %734 = vsyncpa [#allocation3], 1
    %s735 = scalar_lea.sflag [#allocation3], 1
    %736 = vsyncpa %s735, 1

</llo_original>
